<compile_context>
chip_gen: v5e
topology: v5e:2x2
jax: 0.10.0
libtpu: 0.0.40
codegen_flags: <defaults>
</compile_context>

<pallas_src>
import numpy as np
import jax
import jax.numpy as jnp
from jax.experimental import pallas as pl
from jax.experimental.pallas import tpu as pltpu

GRID_SIZE = 9
LANE = 128      # TPU lane width (last dim)
SUBLANE = 8     # TPU sublane width for f32 (second-to-last dim)
BN_EPS = 1e-5


def _round_up(n, m):
    return ((n + m - 1) // m) * m


def _ru(n):
    return _round_up(n, LANE)


def _pad2d(a, rows, cols):
    a = np.asarray(a, np.float32)
    out = np.zeros((rows, cols), np.float32)
    out[: a.shape[0], : a.shape[1]] = a
    return out


# ---------------------------------------------------------------------------
# Parameter init: kaiming_normal(mode='fan_out', relu), zero biases, BN at
# identity -- same distributions as the PyTorch module's _initialize_weights().
# ---------------------------------------------------------------------------
def init_params(key, input_channels, num_actions):
    C = input_channels
    feat = (GRID_SIZE // 4) ** 2 * 4 * C          # == 16 * C

    def conv_w(k, co, ci):
        std = (2.0 / (co * 9)) ** 0.5             # fan_out = co * kh * kw
        return std * jax.random.normal(k, (co, ci, 3, 3), dtype=jnp.float32)

    def fc_w(k, out_f, in_f):
        std = (2.0 / out_f) ** 0.5                # fan_out = out_features
        return std * jax.random.normal(k, (out_f, in_f), dtype=jnp.float32)

    k = jax.random.split(key, 5)
    z = lambda n: jnp.zeros((n,), jnp.float32)
    o = lambda n: jnp.ones((n,), jnp.float32)
    return {
        "conv1_w": conv_w(k[0], 2 * C, C), "conv1_b": z(2 * C),
        "bn1_gamma": o(2 * C), "bn1_beta": z(2 * C),
        "bn1_mean": z(2 * C), "bn1_var": o(2 * C),
        "conv2_w": conv_w(k[1], 4 * C, 2 * C), "conv2_b": z(4 * C),
        "bn2_gamma": o(4 * C), "bn2_beta": z(4 * C),
        "bn2_mean": z(4 * C), "bn2_var": o(4 * C),
        "fc1_w": fc_w(k[2], 128, feat), "fc1_b": z(128),
        "fc2_w": fc_w(k[3], 64, 128), "fc2_b": z(64),
        "fc3_w": fc_w(k[4], num_actions, 64), "fc3_b": z(num_actions),
    }


# ---------------------------------------------------------------------------
# Host-side (one-time) operator construction.
# Flattened activation layout everywhere is channel-major: col = c*(H*W)+h*W+w,
# which is exactly what x.reshape(B,-1) / nn.Flatten produce from NCHW.
# ---------------------------------------------------------------------------
def _conv3x3_same_as_matrix(w, H, W):
    """Dense (Cin*H*W, Cout*H*W) matrix M with x_flat @ M == conv2d(x, w, pad=1)."""
    w = np.asarray(w, np.float32)
    Co, Ci, KH, KW = w.shape
    M = np.zeros((Ci * H * W, Co * H * W), np.float32)
    ci_off = np.arange(Ci)[:, None] * (H * W)
    co_off = np.arange(Co)[None, :] * (H * W)
    for di in range(KH):
        for dj in range(KW):
            wt = w[:, :, di, dj].T                       # (Ci, Co)
            for ph in range(H):
                ih = ph + di - 1
                if ih < 0 or ih >= H:
                    continue
                for pw in range(W):
                    iw = pw + dj - 1
                    if iw < 0 or iw >= W:
                        continue
                    M[ci_off + (ih * W + iw), co_off + (ph * W + pw)] += wt
    return M


def _maxpool2_select_matrices(C, H, W):
    """Four (C*H*W, C*Ho*Wo) 0/1 matrices; max_k(h @ Pk) == MaxPool2d(2)(h)."""
    Ho, Wo = H // 2, W // 2
    c_in = np.arange(C) * (H * W)
    c_out = np.arange(C) * (Ho * Wo)
    mats = []
    for di in range(2):
        for dj in range(2):
            P = np.zeros((C * H * W, C * Ho * Wo), np.float32)
            for oh in range(Ho):
                for ow in range(Wo):
                    P[c_in + (2 * oh + di) * W + (2 * ow + dj),
                      c_out + oh * Wo + ow] = 1.0
            mats.append(P)
    return mats


def _fold_bn_channel(conv_b, gamma, beta, mean, var):
    """Fold conv bias + inference BatchNorm into per-channel scale/shift."""
    s = np.asarray(gamma, np.float32) / np.sqrt(np.asarray(var, np.float32) + BN_EPS)
    t = (np.asarray(conv_b, np.float32) - np.asarray(mean, np.float32)) * s \
        + np.asarray(beta, np.float32)
    return s, t


def build_operands(params, input_channels, num_actions):
    C = input_channels
    H = W = GRID_SIZE                 # 9
    H1 = W1 = H // 2                  # 4  (MaxPool2d(2) floors 9 -> 4)
    H2 = W2 = H1 // 2                 # 2
    C1, C2 = 2 * C, 4 * C

    d_in = C * H * W                  # 324
    d_p1 = C1 * H1 * W1               # 128
    d_p2 = C2 * H2 * W2               # 64 == feature_size
    D_in = _ru(d_in)                  # 384
    D_p1 = _ru(d_p1)                  # 128
    D_mid = max(_ru(d_p2), 128, _ru(num_actions))   # 128 here
    D_vec = max(D_p1, D_mid)

    # ---- stage 1: conv1 (as matrix) with the 4 pool selectors folded in ----
    M1 = _conv3x3_same_as_matrix(params["conv1_w"], H, W)
    P1 = _maxpool2_select_matrices(C1, H, W)
    m1_cat = np.concatenate([_pad2d(M1 @ P, D_in, D_p1) for P in P1], axis=1)
    s1c, t1c = _fold_bn_channel(params["conv1_b"], params["bn1_gamma"],
                                params["bn1_beta"], params["bn1_mean"],
                                params["bn1_var"])
    s1 = np.repeat(s1c, H1 * W1)      # pooled layout is channel-major
    t1 = np.repeat(t1c, H1 * W1)

    # ---- stage 2: conv2 with the 4 pool selectors folded in ----------------
    M2 = _conv3x3_same_as_matrix(params["conv2_w"], H1, W1)
    P2 = _maxpool2_select_matrices(C2, H1, W1)
    m2_cat = np.concatenate([_pad2d(M2 @ P, D_p1, D_mid) for P in P2], axis=1)
    s2c, t2c = _fold_bn_channel(params["conv2_b"], params["bn2_gamma"],
                                params["bn2_beta"], params["bn2_mean"],
                                params["bn2_var"])
    s2 = np.repeat(s2c, H2 * W2)
    t2 = np.repeat(t2c, H2 * W2)

    # ---- MLP head: one stacked (3, D_mid, D_mid) weight slab ---------------
    head = np.zeros((3, D_mid, D_mid), np.float32)
    head[0, :d_p2, :128] = np.asarray(params["fc1_w"], np.float32).T
    head[1, :128, :64] = np.asarray(params["fc2_w"], np.float32).T
    head[2, :64, :num_actions] = np.asarray(params["fc3_w"], np.float32).T

    # ---- single f32 vector slab: s1,t1,s2,t2,b5,b6,b7 ----------------------
    vec = np.zeros((8, D_vec), np.float32)
    vec[0, :d_p1] = s1
    vec[1, :d_p1] = t1
    vec[2, :d_p2] = s2
    vec[3, :d_p2] = t2
    vec[4, :128] = np.asarray(params["fc1_b"], np.float32)
    vec[5, :64] = np.asarray(params["fc2_b"], np.float32)
    vec[6, :num_actions] = np.asarray(params["fc3_b"], np.float32)

    ops = {
        "m1": jnp.asarray(m1_cat, jnp.bfloat16),
        "m2": jnp.asarray(m2_cat, jnp.bfloat16),
        "head": jnp.asarray(head, jnp.bfloat16),
        "vec": jnp.asarray(vec, jnp.float32),
    }
    meta = {"d_in": d_in, "D_in": D_in, "D_p1": D_p1, "D_mid": D_mid,
            "num_actions": num_actions}
    return ops, meta


# ---------------------------------------------------------------------------
# The fused kernel: everything lives whole in VMEM (< 1 MiB total), no grid.
# ---------------------------------------------------------------------------
def _make_kernel(D_p1, D_mid):
    def kernel(x_ref, m1_ref, m2_ref, head_ref, vec_ref, o_ref):
        f32, bf16 = jnp.float32, jnp.bfloat16
        vec = vec_ref[...]

        # conv1 + folded BN1 + ReLU + MaxPool2 (selectors folded into m1_cat):
        # one matmul, then max over the four 128-lane window-offset chunks.
        z = jnp.dot(x_ref[...], m1_ref[...], preferred_element_type=f32)
        s1 = vec[0:1, :D_p1]
        t1 = vec[1:2, :D_p1]
        h = jnp.maximum(z[:, 0:D_p1] * s1 + t1, 0.0)
        for k in range(1, 4):
            h = jnp.maximum(
                h, jnp.maximum(z[:, k * D_p1:(k + 1) * D_p1] * s1 + t1, 0.0))

        # conv2 + folded BN2 + ReLU + MaxPool2 (same trick).
        z = jnp.dot(h.astype(bf16), m2_ref[...], preferred_element_type=f32)
        s2 = vec[2:3, :D_mid]
        t2 = vec[3:4, :D_mid]
        h = jnp.maximum(z[:, 0:D_mid] * s2 + t2, 0.0)
        for k in range(1, 4):
            h = jnp.maximum(
                h, jnp.maximum(z[:, k * D_mid:(k + 1) * D_mid] * s2 + t2, 0.0))

        # MLP head (Dropout = identity in inference).
        h = jnp.maximum(jnp.dot(h.astype(bf16), head_ref[0],
                                preferred_element_type=f32)
                        + vec[4:5, :D_mid], 0.0)
        h = jnp.maximum(jnp.dot(h.astype(bf16), head_ref[1],
                                preferred_element_type=f32)
                        + vec[5:6, :D_mid], 0.0)
        o_ref[...] = (jnp.dot(h.astype(bf16), head_ref[2],
                              preferred_element_type=f32)
                      + vec[6:7, :D_mid]).astype(o_ref.dtype)
    return kernel


def _pad_input(x_nchw, meta):
    B = x_nchw.shape[0]
    Bp = _round_up(max(B, 1), SUBLANE)
    # NCHW row-major flatten == nn.Flatten layout; cast to bf16 in the wrapper
    # (halves the input DMA, avoids in-kernel casts).
    x_flat = x_nchw.reshape(B, -1).astype(jnp.bfloat16)
    x_pad = jnp.zeros((Bp, meta["D_in"]), jnp.bfloat16)
    x_pad = x_pad.at[:B, : meta["d_in"]].set(x_flat)
    return x_pad, B, Bp


def dqn_forward(x_nchw, ops, meta):
    """x_nchw: (B, C, 9, 9) float32. Returns (B, num_actions) float32."""
    x_pad, B, Bp = _pad_input(x_nchw, meta)
    D_in, D_p1, D_mid = meta["D_in"], meta["D_p1"], meta["D_mid"]
    operands = [x_pad, ops["m1"], ops["m2"], ops["head"], ops["vec"]]

    flops = 2 * Bp * (D_in * 4 * D_p1 + D_p1 * 4 * D_mid + 3 * D_mid * D_mid)
    bytes_accessed = int(sum(int(a.size) * a.dtype.itemsize for a in operands)
                         + Bp * D_mid * 4)

    vmem_spec = pl.BlockSpec(memory_space=pltpu.MemorySpace.VMEM)
    out = pl.pallas_call(
        _make_kernel(D_p1, D_mid),
        out_shape=jax.ShapeDtypeStruct((Bp, D_mid), jnp.float32),
        in_specs=[vmem_spec] * len(operands),
        out_specs=vmem_spec,
        cost_estimate=pl.CostEstimate(flops=int(flops), transcendentals=0,
                                      bytes_accessed=bytes_accessed),
    )(*operands)
    # Slice the lane/sublane padding back off.
    return out[:B, : meta["num_actions"]]


# ---------------------------------------------------------------------------
# References for the self-check
# ---------------------------------------------------------------------------
def padded_reference(x_pad, ops, meta):
    """Identical math to the kernel (same padded bf16 operands), plain jnp."""
    D_p1, D_mid = meta["D_p1"], meta["D_mid"]
    f32, bf16 = jnp.float32, jnp.bfloat16
    vec = ops["vec"]
    z = jnp.dot(x_pad, ops["m1"], preferred_element_type=f32)
    s1, t1 = vec[0:1, :D_p1], vec[1:2, :D_p1]
    h = jnp.maximum(z[:, :D_p1] * s1 + t1, 0.0)
    for k in range(1, 4):
        h = jnp.maximum(h, jnp.maximum(
            z[:, k * D_p1:(k + 1) * D_p1] * s1 + t1, 0.0))
    z = jnp.dot(h.astype(bf16), ops["m2"], preferred_element_type=f32)
    s2, t2 = vec[2:3, :D_mid], vec[3:4, :D_mid]
    h = jnp.maximum(z[:, :D_mid] * s2 + t2, 0.0)
    for k in range(1, 4):
        h = jnp.maximum(h, jnp.maximum(
            z[:, k * D_mid:(k + 1) * D_mid] * s2 + t2, 0.0))
    h = jnp.maximum(jnp.dot(h.astype(bf16), ops["head"][0],
                            preferred_element_type=f32) + vec[4:5, :D_mid], 0.0)
    h = jnp.maximum(jnp.dot(h.astype(bf16), ops["head"][1],
                            preferred_element_type=f32) + vec[5:6, :D_mid], 0.0)
    return jnp.dot(h.astype(bf16), ops["head"][2],
                   preferred_element_type=f32) + vec[6:7, :D_mid]


def direct_reference(x_nchw, params):
    """f32 NCHW reference with the PyTorch (eval-mode) semantics."""
    x = np.asarray(x_nchw, np.float32)

    def conv3x3(x, w, b):
        w = np.asarray(w, np.float32)
        B, Ci, H, W = x.shape
        Co = w.shape[0]
        xp = np.zeros((B, Ci, H + 2, W + 2), np.float32)
        xp[:, :, 1:-1, 1:-1] = x
        y = np.zeros((B, Co, H, W), np.float32)
        for di in range(3):
            for dj in range(3):
                y += np.einsum("bchw,oc->bohw", xp[:, :, di:di + H, dj:dj + W],
                               w[:, :, di, dj])
        return y + np.asarray(b, np.float32)[None, :, None, None]

    def bn(x, g, be, m, v):
        g, be, m, v = (np.asarray(a, np.float32)[None, :, None, None]
                       for a in (g, be, m, v))
        return (x - m) / np.sqrt(v + BN_EPS) * g + be

    def pool2(x):
        B, C, H, W = x.shape
        Ho, Wo = H // 2, W // 2
        return x[:, :, :2 * Ho, :2 * Wo].reshape(B, C, Ho, 2, Wo, 2).max(axis=(3, 5))

    h = pool2(np.maximum(bn(conv3x3(x, params["conv1_w"], params["conv1_b"]),
                            params["bn1_gamma"], params["bn1_beta"],
                            params["bn1_mean"], params["bn1_var"]), 0.0))
    h = pool2(np.maximum(bn(conv3x3(h, params["conv2_w"], params["conv2_b"]),
                            params["bn2_gamma"], params["bn2_beta"],
                            params["bn2_mean"], params["bn2_var"]), 0.0))
    h = h.reshape(h.shape[0], -1)
    h = np.maximum(h @ np.asarray(params["fc1_w"], np.float32).T
                   + np.asarray(params["fc1_b"], np.float32), 0.0)
    h = np.maximum(h @ np.asarray(params["fc2_w"], np.float32).T
                   + np.asarray(params["fc2_b"], np.float32), 0.0)
    return h @ np.asarray(params["fc3_w"], np.float32).T \
        + np.asarray(params["fc3_b"], np.float32)


if __name__ == "__main__":
    key = jax.random.PRNGKey(0)
    batch, channels, num_actions = 2, 4, 8

    key, xk, pk = jax.random.split(key, 3)
    x = jax.random.normal(xk, (batch, channels, GRID_SIZE, GRID_SIZE),
                          dtype=jnp.float32)
    params = init_params(pk, channels, num_actions)
    ops, meta = build_operands(params, channels, num_actions)

    out = dqn_forward(x, ops, meta)
    out = jax.block_until_ready(out)
    assert out.shape == (batch, num_actions)

    # (a) Pallas kernel vs identical-math jnp reference (same bf16 operands).
    x_pad, _, _ = _pad_input(x, meta)
    ref_a = padded_reference(x_pad, ops, meta)[:batch, :num_actions]
    assert jnp.allclose(out, ref_a, atol=2e-3, rtol=2e-3), "kernel != padded reference"

    # (b) vs direct f32 NCHW reference (loose tol: weights/inputs stored in bf16).
    ref_b = direct_reference(x, params)
    assert np.allclose(np.asarray(out), ref_b, atol=2e-1, rtol=5e-2), \
        "kernel != direct conv/pool/MLP reference"

    print("KERNEL_OK")
</pallas_src>

<mosaic_0001>
module attributes {stable_mosaic.version = 11 : i64} {
  func.func @kernel(%arg0: memref<8x384xbf16, #tpu.memory_space<vmem>>, %arg1: memref<384x512xbf16, #tpu.memory_space<vmem>>, %arg2: memref<128x512xbf16, #tpu.memory_space<vmem>>, %arg3: memref<3x128x128xbf16, #tpu.memory_space<vmem>>, %arg4: memref<8x128xf32, #tpu.memory_space<vmem>>, %arg5: memref<8x128xf32, #tpu.memory_space<vmem>>) attributes {dimension_semantics = [], scalar_prefetch = 0 : i64, scratch_operands = 0 : i64, tpu.core_type = #tpu.core_type<tc>} {
    %c0 = arith.constant 0 : index
    %c0_0 = arith.constant 0 : index
    %0 = vector.load %arg4[%c0, %c0_0] : memref<8x128xf32, #tpu.memory_space<vmem>>, vector<8x128xf32>
    %c0_1 = arith.constant 0 : index
    %c0_2 = arith.constant 0 : index
    %1 = vector.load %arg0[%c0_1, %c0_2] : memref<8x384xbf16, #tpu.memory_space<vmem>>, vector<8x384xbf16>
    %c0_3 = arith.constant 0 : index
    %c0_4 = arith.constant 0 : index
    %2 = vector.load %arg1[%c0_3, %c0_4] : memref<384x512xbf16, #tpu.memory_space<vmem>>, vector<384x512xbf16>
    %cst = arith.constant dense<0.000000e+00> : vector<8x512xf32>
    %3 = tpu.matmul %1, %2, %cst {dimension_numbers = #tpu.dot_dimension_numbers<[1], [0], [0], [1], [0, 0, 1, 1], [], []>} : vector<8x384xbf16>, vector<384x512xbf16>, vector<8x512xf32> -> vector<8x512xf32>
    %4 = vector.extract_strided_slice %0 {offsets = [0, 0], sizes = [1, 128], strides = [1, 1]} : vector<8x128xf32> to vector<1x128xf32>
    %5 = vector.extract_strided_slice %0 {offsets = [1, 0], sizes = [1, 128], strides = [1, 1]} : vector<8x128xf32> to vector<1x128xf32>
    %6 = vector.extract_strided_slice %3 {offsets = [0, 0], sizes = [8, 128], strides = [1, 1]} : vector<8x512xf32> to vector<8x128xf32>
    %7 = vector.broadcast %4 : vector<1x128xf32> to vector<8x128xf32>
    %8 = arith.mulf %6, %7 : vector<8x128xf32>
    %9 = vector.broadcast %5 : vector<1x128xf32> to vector<8x128xf32>
    %10 = arith.addf %8, %9 : vector<8x128xf32>
    %cst_5 = arith.constant 0.000000e+00 : f32
    %11 = vector.broadcast %cst_5 : f32 to vector<8x128xf32>
    %12 = arith.maximumf %10, %11 : vector<8x128xf32>
    %13 = vector.extract_strided_slice %3 {offsets = [0, 128], sizes = [8, 128], strides = [1, 1]} : vector<8x512xf32> to vector<8x128xf32>
    %14 = vector.broadcast %4 : vector<1x128xf32> to vector<8x128xf32>
    %15 = arith.mulf %13, %14 : vector<8x128xf32>
    %16 = vector.broadcast %5 : vector<1x128xf32> to vector<8x128xf32>
    %17 = arith.addf %15, %16 : vector<8x128xf32>
    %cst_6 = arith.constant 0.000000e+00 : f32
    %18 = vector.broadcast %cst_6 : f32 to vector<8x128xf32>
    %19 = arith.maximumf %17, %18 : vector<8x128xf32>
    %20 = arith.maximumf %12, %19 : vector<8x128xf32>
    %21 = vector.extract_strided_slice %3 {offsets = [0, 256], sizes = [8, 128], strides = [1, 1]} : vector<8x512xf32> to vector<8x128xf32>
    %22 = vector.broadcast %4 : vector<1x128xf32> to vector<8x128xf32>
    %23 = arith.mulf %21, %22 : vector<8x128xf32>
    %24 = vector.broadcast %5 : vector<1x128xf32> to vector<8x128xf32>
    %25 = arith.addf %23, %24 : vector<8x128xf32>
    %cst_7 = arith.constant 0.000000e+00 : f32
    %26 = vector.broadcast %cst_7 : f32 to vector<8x128xf32>
    %27 = arith.maximumf %25, %26 : vector<8x128xf32>
    %28 = arith.maximumf %20, %27 : vector<8x128xf32>
    %29 = vector.extract_strided_slice %3 {offsets = [0, 384], sizes = [8, 128], strides = [1, 1]} : vector<8x512xf32> to vector<8x128xf32>
    %30 = vector.broadcast %4 : vector<1x128xf32> to vector<8x128xf32>
    %31 = arith.mulf %29, %30 : vector<8x128xf32>
    %32 = vector.broadcast %5 : vector<1x128xf32> to vector<8x128xf32>
    %33 = arith.addf %31, %32 : vector<8x128xf32>
    %cst_8 = arith.constant 0.000000e+00 : f32
    %34 = vector.broadcast %cst_8 : f32 to vector<8x128xf32>
    %35 = arith.maximumf %33, %34 : vector<8x128xf32>
    %36 = arith.maximumf %28, %35 : vector<8x128xf32>
    %37 = arith.truncf %36 : vector<8x128xf32> to vector<8x128xbf16>
    %c0_9 = arith.constant 0 : index
    %c0_10 = arith.constant 0 : index
    %38 = vector.load %arg2[%c0_9, %c0_10] : memref<128x512xbf16, #tpu.memory_space<vmem>>, vector<128x512xbf16>
    %cst_11 = arith.constant dense<0.000000e+00> : vector<8x512xf32>
    %39 = tpu.matmul %37, %38, %cst_11 {dimension_numbers = #tpu.dot_dimension_numbers<[1], [0], [0], [1], [0, 0, 1, 1], [], []>} : vector<8x128xbf16>, vector<128x512xbf16>, vector<8x512xf32> -> vector<8x512xf32>
    %40 = vector.extract_strided_slice %0 {offsets = [2, 0], sizes = [1, 128], strides = [1, 1]} : vector<8x128xf32> to vector<1x128xf32>
    %41 = vector.extract_strided_slice %0 {offsets = [3, 0], sizes = [1, 128], strides = [1, 1]} : vector<8x128xf32> to vector<1x128xf32>
    %42 = vector.extract_strided_slice %39 {offsets = [0, 0], sizes = [8, 128], strides = [1, 1]} : vector<8x512xf32> to vector<8x128xf32>
    %43 = vector.broadcast %40 : vector<1x128xf32> to vector<8x128xf32>
    %44 = arith.mulf %42, %43 : vector<8x128xf32>
    %45 = vector.broadcast %41 : vector<1x128xf32> to vector<8x128xf32>
    %46 = arith.addf %44, %45 : vector<8x128xf32>
    %cst_12 = arith.constant 0.000000e+00 : f32
    %47 = vector.broadcast %cst_12 : f32 to vector<8x128xf32>
    %48 = arith.maximumf %46, %47 : vector<8x128xf32>
    %49 = vector.extract_strided_slice %39 {offsets = [0, 128], sizes = [8, 128], strides = [1, 1]} : vector<8x512xf32> to vector<8x128xf32>
    %50 = vector.broadcast %40 : vector<1x128xf32> to vector<8x128xf32>
    %51 = arith.mulf %49, %50 : vector<8x128xf32>
    %52 = vector.broadcast %41 : vector<1x128xf32> to vector<8x128xf32>
    %53 = arith.addf %51, %52 : vector<8x128xf32>
    %cst_13 = arith.constant 0.000000e+00 : f32
    %54 = vector.broadcast %cst_13 : f32 to vector<8x128xf32>
    %55 = arith.maximumf %53, %54 : vector<8x128xf32>
    %56 = arith.maximumf %48, %55 : vector<8x128xf32>
    %57 = vector.extract_strided_slice %39 {offsets = [0, 256], sizes = [8, 128], strides = [1, 1]} : vector<8x512xf32> to vector<8x128xf32>
    %58 = vector.broadcast %40 : vector<1x128xf32> to vector<8x128xf32>
    %59 = arith.mulf %57, %58 : vector<8x128xf32>
    %60 = vector.broadcast %41 : vector<1x128xf32> to vector<8x128xf32>
    %61 = arith.addf %59, %60 : vector<8x128xf32>
    %cst_14 = arith.constant 0.000000e+00 : f32
    %62 = vector.broadcast %cst_14 : f32 to vector<8x128xf32>
    %63 = arith.maximumf %61, %62 : vector<8x128xf32>
    %64 = arith.maximumf %56, %63 : vector<8x128xf32>
    %65 = vector.extract_strided_slice %39 {offsets = [0, 384], sizes = [8, 128], strides = [1, 1]} : vector<8x512xf32> to vector<8x128xf32>
    %66 = vector.broadcast %40 : vector<1x128xf32> to vector<8x128xf32>
    %67 = arith.mulf %65, %66 : vector<8x128xf32>
    %68 = vector.broadcast %41 : vector<1x128xf32> to vector<8x128xf32>
    %69 = arith.addf %67, %68 : vector<8x128xf32>
    %cst_15 = arith.constant 0.000000e+00 : f32
    %70 = vector.broadcast %cst_15 : f32 to vector<8x128xf32>
    %71 = arith.maximumf %69, %70 : vector<8x128xf32>
    %72 = arith.maximumf %64, %71 : vector<8x128xf32>
    %73 = arith.truncf %72 : vector<8x128xf32> to vector<8x128xbf16>
    %c0_16 = arith.constant 0 : index
    %c0_17 = arith.constant 0 : index
    %c0_18 = arith.constant 0 : index
    %74 = vector.load %arg3[%c0_16, %c0_17, %c0_18] : memref<3x128x128xbf16, #tpu.memory_space<vmem>>, vector<1x128x128xbf16>
    %75 = vector.shape_cast %74 : vector<1x128x128xbf16> to vector<128x128xbf16>
    %cst_19 = arith.constant dense<0.000000e+00> : vector<8x128xf32>
    %76 = tpu.matmul %73, %75, %cst_19 {dimension_numbers = #tpu.dot_dimension_numbers<[1], [0], [0], [1], [0, 0, 1, 1], [], []>} : vector<8x128xbf16>, vector<128x128xbf16>, vector<8x128xf32> -> vector<8x128xf32>
    %77 = vector.extract_strided_slice %0 {offsets = [4, 0], sizes = [1, 128], strides = [1, 1]} : vector<8x128xf32> to vector<1x128xf32>
    %78 = vector.broadcast %77 : vector<1x128xf32> to vector<8x128xf32>
    %79 = arith.addf %76, %78 : vector<8x128xf32>
    %cst_20 = arith.constant 0.000000e+00 : f32
    %80 = vector.broadcast %cst_20 : f32 to vector<8x128xf32>
    %81 = arith.maximumf %79, %80 : vector<8x128xf32>
    %82 = arith.truncf %81 : vector<8x128xf32> to vector<8x128xbf16>
    %c1 = arith.constant 1 : index
    %c0_21 = arith.constant 0 : index
    %c0_22 = arith.constant 0 : index
    %83 = vector.load %arg3[%c1, %c0_21, %c0_22] : memref<3x128x128xbf16, #tpu.memory_space<vmem>>, vector<1x128x128xbf16>
    %84 = vector.shape_cast %83 : vector<1x128x128xbf16> to vector<128x128xbf16>
    %cst_23 = arith.constant dense<0.000000e+00> : vector<8x128xf32>
    %85 = tpu.matmul %82, %84, %cst_23 {dimension_numbers = #tpu.dot_dimension_numbers<[1], [0], [0], [1], [0, 0, 1, 1], [], []>} : vector<8x128xbf16>, vector<128x128xbf16>, vector<8x128xf32> -> vector<8x128xf32>
    %86 = vector.extract_strided_slice %0 {offsets = [5, 0], sizes = [1, 128], strides = [1, 1]} : vector<8x128xf32> to vector<1x128xf32>
    %87 = vector.broadcast %86 : vector<1x128xf32> to vector<8x128xf32>
    %88 = arith.addf %85, %87 : vector<8x128xf32>
    %cst_24 = arith.constant 0.000000e+00 : f32
    %89 = vector.broadcast %cst_24 : f32 to vector<8x128xf32>
    %90 = arith.maximumf %88, %89 : vector<8x128xf32>
    %91 = arith.truncf %90 : vector<8x128xf32> to vector<8x128xbf16>
    %c2 = arith.constant 2 : index
    %c0_25 = arith.constant 0 : index
    %c0_26 = arith.constant 0 : index
    %92 = vector.load %arg3[%c2, %c0_25, %c0_26] : memref<3x128x128xbf16, #tpu.memory_space<vmem>>, vector<1x128x128xbf16>
    %93 = vector.shape_cast %92 : vector<1x128x128xbf16> to vector<128x128xbf16>
    %cst_27 = arith.constant dense<0.000000e+00> : vector<8x128xf32>
    %94 = tpu.matmul %91, %93, %cst_27 {dimension_numbers = #tpu.dot_dimension_numbers<[1], [0], [0], [1], [0, 0, 1, 1], [], []>} : vector<8x128xbf16>, vector<128x128xbf16>, vector<8x128xf32> -> vector<8x128xf32>
    %95 = vector.extract_strided_slice %0 {offsets = [6, 0], sizes = [1, 128], strides = [1, 1]} : vector<8x128xf32> to vector<1x128xf32>
    %96 = vector.broadcast %95 : vector<1x128xf32> to vector<8x128xf32>
    %97 = arith.addf %94, %96 : vector<8x128xf32>
    %c0_28 = arith.constant 0 : index
    %c0_29 = arith.constant 0 : index
    %98 = vector.load %arg5[%c0_28, %c0_29] : memref<8x128xf32, #tpu.memory_space<vmem>>, vector<8x128xf32>
    tpu.vector_store %arg5[%c0_28, %c0_29], %97 {strides = array<i32>} : memref<8x128xf32, #tpu.memory_space<vmem>>, vector<8x128xf32>,
    return
  }
}

</mosaic_0001>

<llo_original>
// kernel: tpu_custom_call.1
$region0: #{tpu_custom_call.1}
  #allocation0 [shape = 'u32[]', space=smem, size = 0x4, offset = 0x4, fixed_abs, tag = 'smem constant byte address 0x4 - core index']
  #allocation1 [shape = 'u32[72,128]{1,0:T(1,128)}', space=vmem, size = 0x9000, scoped, tag = 'internal scratch']
  %s0 = inlined_call_operand.hbm [shape: bf16[8,384], index: 0, kind: input, shape index: {}]
  %s1 = inlined_call_operand.hbm [shape: bf16[384,512], index: 1, kind: input, shape index: {}]
  %s2 = inlined_call_operand.hbm [shape: bf16[128,512], index: 2, kind: input, shape index: {}]
  %s3 = inlined_call_operand.hbm [shape: bf16[3,128,128], index: 3, kind: input, shape index: {}]
  %s4 = inlined_call_operand.hbm [shape: f32[8,128], index: 4, kind: input, shape index: {}]
  %s5 = inlined_call_operand.hbm [shape: f32[8,128], index: 5, kind: output, shape index: {}]
  %s6 = sld [smem:[#allocation0]]
  $region50: #{tpu_custom_call.1} parent=0
    _
  %s8 = ssub.s32 1, %s6
  %s9 = scalar_select 0, %s8, %s6
  $region1: #{tpu_custom_call.1} parent=0
    #allocation2 [shape = 'u8[6144]{0}', space=vmem, size = 0x1800, scoped, tag = 'input window, operand 0, single buffered']
    #allocation3 [shape = 's32[1]{0}', space=sflag, size = 0x4, scoped, tag = 'scoped memory for tpu_custom_call.1']
    #allocation4 [shape = 's32[1]{0}', space=sflag, size = 0x4, scoped, tag = 'scoped memory for tpu_custom_call.1']
    #allocation5 [shape = 'u8[393216]{0}', space=vmem, size = 0x60000, scoped, tag = 'input window, operand 1, single buffered']
    #allocation6 [shape = 's32[1]{0}', space=sflag, size = 0x4, scoped, tag = 'scoped memory for tpu_custom_call.1']
    #allocation7 [shape = 'u8[131072]{0}', space=vmem, size = 0x20000, scoped, tag = 'input window, operand 2, single buffered']
    #allocation8 [shape = 'u8[98304]{0}', space=vmem, size = 0x18000, scoped, tag = 'input window, operand 3, single buffered']
    #allocation9 [shape = 's32[1]{0}', space=sflag, size = 0x4, scoped, tag = 'scoped memory for tpu_custom_call.1']
    #allocation10 [shape = 'u8[4096]{0}', space=vmem, size = 0x1000, scoped, tag = 'input window, operand 4, single buffered']
    #allocation11 [shape = 'u8[4096]{0}', space=vmem, size = 0x1000, scoped, tag = 'output window, operand 0, single buffered']
    %10 = vsyncpa [#allocation3], 0
    %11 = vsyncpa [#allocation6], 0
    %12 = vsyncpa [#allocation9], 0
    %13 = vsyncpa [#allocation4], 0
    // Predicated region
    $region2: #{tpu_custom_call.1} parent=1 // pred_check
      _
    $region3: #{tpu_custom_call.1} parent=1 // pred_check_branch
      %15 = sbr.rel (0) target = $region5
    $region4: #{tpu_custom_call.1} parent=1 // pred_region
      %17 = vsyncadd [#allocation3], 0
      %s19 = sshll.u32 %s0, 4
      %s20 = int_to_ptr.hbm [resolvable:$true] %s19
      %s21 = sshll.u32 [#allocation2], 4
      %s22 = int_to_ptr.vmem [resolvable:$true] %s21
      %24 = dma.hbm_to_vmem [thread:$0]  %s20, 192, %s22, [#allocation3]
    $region5: #{tpu_custom_call.1} parent=1 // pred_fallthru
      _
    // Predicated region
    $region6: #{tpu_custom_call.1} parent=1 // pred_check
      _
    $region7: #{tpu_custom_call.1} parent=1 // pred_check_branch
      %26 = sbr.rel (0) target = $region9
    $region8: #{tpu_custom_call.1} parent=1 // pred_region
      %28 = vsyncadd [#allocation6], 0
      %s29 = sshll.u32 %s1, 4
      %s30 = int_to_ptr.hbm [resolvable:$true] %s29
      %s31 = sshll.u32 [#allocation5], 4
      %s32 = int_to_ptr.vmem [resolvable:$true] %s31
      %37 = dma.hbm_to_vmem [thread:$0]  %s30, 12288, %s32, [#allocation6], 256, 256, 16
    $region9: #{tpu_custom_call.1} parent=1 // pred_fallthru
      _
    // Predicated region
    $region10: #{tpu_custom_call.1} parent=1 // pred_check
      _
    $region11: #{tpu_custom_call.1} parent=1 // pred_check_branch
      %39 = sbr.rel (0) target = $region13
    $region12: #{tpu_custom_call.1} parent=1 // pred_region
      %41 = vsyncadd [#allocation6], 0
      %s42 = sshll.u32 %s2, 4
      %s43 = int_to_ptr.hbm [resolvable:$true] %s42
      %s44 = sshll.u32 [#allocation7], 4
      %s45 = int_to_ptr.vmem [resolvable:$true] %s44
      %50 = dma.hbm_to_vmem [thread:$0]  %s43, 4096, %s45, [#allocation6], 256, 256, 16
    $region13: #{tpu_custom_call.1} parent=1 // pred_fallthru
      _
    // Predicated region
    $region14: #{tpu_custom_call.1} parent=1 // pred_check
      _
    $region15: #{tpu_custom_call.1} parent=1 // pred_check_branch
      %52 = sbr.rel (0) target = $region17
    $region16: #{tpu_custom_call.1} parent=1 // pred_region
      %54 = vsyncadd [#allocation9], 0
      %s55 = sshll.u32 %s3, 4
      %s56 = int_to_ptr.hbm [resolvable:$true] %s55
      %s57 = sshll.u32 [#allocation8], 4
      %s58 = int_to_ptr.vmem [resolvable:$true] %s57
      %63 = dma.hbm_to_vmem [thread:$0]  %s56, 3072, %s58, [#allocation9], 64, 64, 4
    $region17: #{tpu_custom_call.1} parent=1 // pred_fallthru
      _
    // Predicated region
    $region18: #{tpu_custom_call.1} parent=1 // pred_check
      _
    $region19: #{tpu_custom_call.1} parent=1 // pred_check_branch
      %65 = sbr.rel (0) target = $region21
    $region20: #{tpu_custom_call.1} parent=1 // pred_region
      %67 = vsyncadd [#allocation9], 0
      %s69 = sshll.u32 %s4, 4
      %s70 = int_to_ptr.hbm [resolvable:$true] %s69
      %s71 = sshll.u32 [#allocation10], 4
      %s72 = int_to_ptr.vmem [resolvable:$true] %s71
      %74 = dma.hbm_to_vmem [thread:$0]  %s70, 128, %s72, [#allocation9]
    $region21: #{tpu_custom_call.1} parent=1 // pred_fallthru
      _
    // Predicated region
    $region22: #{tpu_custom_call.1} parent=1 // pred_check
      _
    $region23: #{tpu_custom_call.1} parent=1 // pred_check_branch
      %76 = sbr.rel (0) target = $region25
    $region24: #{tpu_custom_call.1} parent=1 // pred_region
      %78 = dma.done [#allocation3], 192
    $region25: #{tpu_custom_call.1} parent=1 // pred_fallthru
      _
    // Predicated region
    $region26: #{tpu_custom_call.1} parent=1 // pred_check
      _
    $region27: #{tpu_custom_call.1} parent=1 // pred_check_branch
      %80 = sbr.rel (0) target = $region29
    $region28: #{tpu_custom_call.1} parent=1 // pred_region
      %82 = dma.done [#allocation6], 12288
    $region29: #{tpu_custom_call.1} parent=1 // pred_fallthru
      _
    // Predicated region
    $region30: #{tpu_custom_call.1} parent=1 // pred_check
      _
    $region31: #{tpu_custom_call.1} parent=1 // pred_check_branch
      %84 = sbr.rel (0) target = $region33
    $region32: #{tpu_custom_call.1} parent=1 // pred_region
      %86 = dma.done [#allocation6], 4096
    $region33: #{tpu_custom_call.1} parent=1 // pred_fallthru
      _
    // Predicated region
    $region34: #{tpu_custom_call.1} parent=1 // pred_check
      _
    $region35: #{tpu_custom_call.1} parent=1 // pred_check_branch
      %88 = sbr.rel (0) target = $region37
    $region36: #{tpu_custom_call.1} parent=1 // pred_region
      %90 = dma.done [#allocation9], 3072
    $region37: #{tpu_custom_call.1} parent=1 // pred_fallthru
      _
    // Predicated region
    $region38: #{tpu_custom_call.1} parent=1 // pred_check
      _
    $region39: #{tpu_custom_call.1} parent=1 // pred_check_branch
      %92 = sbr.rel (0) target = $region41
    $region40: #{tpu_custom_call.1} parent=1 // pred_region
      %94 = dma.done [#allocation9], 128
    $region41: #{tpu_custom_call.1} parent=1 // pred_fallthru
      _
    %v95 = vld [vmem:[#allocation10] sm:$0xff]
    %v96 = vld [vmem:[#allocation2] sm:$0xff]
    %v97 = vld [vmem:[#allocation2 + $0x8] sm:$0xf]
    %v98 = vld [vmem:[#allocation5] sm:$0xff]
    %v99 = vld [vmem:[#allocation5 + $0x8] sm:$0xff]
    %v100 = vld [vmem:[#allocation5 + $0x10] sm:$0xff]
    %v101 = vld [vmem:[#allocation5 + $0x18] sm:$0xff]
    %v102 = vld [vmem:[#allocation5 + $0x20] sm:$0xff]
    %v103 = vld [vmem:[#allocation5 + $0x28] sm:$0xff]
    %v104 = vld [vmem:[#allocation5 + $0x30] sm:$0xff]
    %v105 = vld [vmem:[#allocation5 + $0x38] sm:$0xff]
    %v106 = vld [vmem:[#allocation5 + $0x40] sm:$0xff]
    %v107 = vld [vmem:[#allocation5 + $0x48] sm:$0xff]
    %v108 = vld [vmem:[#allocation5 + $0x50] sm:$0xff]
    %v109 = vld [vmem:[#allocation5 + $0x58] sm:$0xff]
    %v110 = vld [vmem:[#allocation5 + $0x60] sm:$0xff]
    %v111 = vld [vmem:[#allocation5 + $0x68] sm:$0xff]
    %v112 = vld [vmem:[#allocation5 + $0x70] sm:$0xff]
    %v113 = vld [vmem:[#allocation5 + $0x78] sm:$0xff]
    %v114 = vld [vmem:[#allocation5 + $0x80] sm:$0xff]
    %v115 = vld [vmem:[#allocation5 + $0x88] sm:$0xff]
    %v116 = vld [vmem:[#allocation5 + $0x90] sm:$0xff]
    %v117 = vld [vmem:[#allocation5 + $0x98] sm:$0xff]
    %v118 = vld [vmem:[#allocation5 + $0xa0] sm:$0xff]
    %v119 = vld [vmem:[#allocation5 + $0xa8] sm:$0xff]
    %v120 = vld [vmem:[#allocation5 + $0xb0] sm:$0xff]
    %v121 = vld [vmem:[#allocation5 + $0xb8] sm:$0xff]
    %v122 = vld [vmem:[#allocation5 + $0xc0] sm:$0xff]
    %v123 = vld [vmem:[#allocation5 + $0xc8] sm:$0xff]
    %v124 = vld [vmem:[#allocation5 + $0xd0] sm:$0xff]
    %v125 = vld [vmem:[#allocation5 + $0xd8] sm:$0xff]
    %v126 = vld [vmem:[#allocation5 + $0xe0] sm:$0xff]
    %v127 = vld [vmem:[#allocation5 + $0xe8] sm:$0xff]
    %v128 = vld [vmem:[#allocation5 + $0xf0] sm:$0xff]
    %v129 = vld [vmem:[#allocation5 + $0xf8] sm:$0xff]
    %v130 = vld [vmem:[#allocation5 + $0x100] sm:$0xff]
    %v131 = vld [vmem:[#allocation5 + $0x108] sm:$0xff]
    %v132 = vld [vmem:[#allocation5 + $0x110] sm:$0xff]
    %v133 = vld [vmem:[#allocation5 + $0x118] sm:$0xff]
    %v134 = vld [vmem:[#allocation5 + $0x120] sm:$0xff]
    %v135 = vld [vmem:[#allocation5 + $0x128] sm:$0xff]
    %v136 = vld [vmem:[#allocation5 + $0x130] sm:$0xff]
    %v137 = vld [vmem:[#allocation5 + $0x138] sm:$0xff]
    %v138 = vld [vmem:[#allocation5 + $0x140] sm:$0xff]
    %v139 = vld [vmem:[#allocation5 + $0x148] sm:$0xff]
    %v140 = vld [vmem:[#allocation5 + $0x150] sm:$0xff]
    %v141 = vld [vmem:[#allocation5 + $0x158] sm:$0xff]
    %v142 = vld [vmem:[#allocation5 + $0x160] sm:$0xff]
    %v143 = vld [vmem:[#allocation5 + $0x168] sm:$0xff]
    %v144 = vld [vmem:[#allocation5 + $0x170] sm:$0xff]
    %v145 = vld [vmem:[#allocation5 + $0x178] sm:$0xff]
    %v146 = vld [vmem:[#allocation5 + $0x180] sm:$0xff]
    %v147 = vld [vmem:[#allocation5 + $0x188] sm:$0xff]
    %v148 = vld [vmem:[#allocation5 + $0x190] sm:$0xff]
    %v149 = vld [vmem:[#allocation5 + $0x198] sm:$0xff]
    %v150 = vld [vmem:[#allocation5 + $0x1a0] sm:$0xff]
    %v151 = vld [vmem:[#allocation5 + $0x1a8] sm:$0xff]
    %v152 = vld [vmem:[#allocation5 + $0x1b0] sm:$0xff]
    %v153 = vld [vmem:[#allocation5 + $0x1b8] sm:$0xff]
    %v154 = vld [vmem:[#allocation5 + $0x1c0] sm:$0xff]
    %v155 = vld [vmem:[#allocation5 + $0x1c8] sm:$0xff]
    %v156 = vld [vmem:[#allocation5 + $0x1d0] sm:$0xff]
    %v157 = vld [vmem:[#allocation5 + $0x1d8] sm:$0xff]
    %v158 = vld [vmem:[#allocation5 + $0x1e0] sm:$0xff]
    %v159 = vld [vmem:[#allocation5 + $0x1e8] sm:$0xff]
    %v160 = vld [vmem:[#allocation5 + $0x1f0] sm:$0xff]
    %v161 = vld [vmem:[#allocation5 + $0x1f8] sm:$0xff]
    %v162 = vld [vmem:[#allocation5 + $0x200] sm:$0xff]
    %v163 = vld [vmem:[#allocation5 + $0x208] sm:$0xff]
    %v164 = vld [vmem:[#allocation5 + $0x210] sm:$0xff]
    %v165 = vld [vmem:[#allocation5 + $0x218] sm:$0xff]
    %v166 = vld [vmem:[#allocation5 + $0x220] sm:$0xff]
    %v167 = vld [vmem:[#allocation5 + $0x228] sm:$0xff]
    %v168 = vld [vmem:[#allocation5 + $0x230] sm:$0xff]
    %v169 = vld [vmem:[#allocation5 + $0x238] sm:$0xff]
    %v170 = vld [vmem:[#allocation5 + $0x240] sm:$0xff]
    %v171 = vld [vmem:[#allocation5 + $0x248] sm:$0xff]
    %v172 = vld [vmem:[#allocation5 + $0x250] sm:$0xff]
    %v173 = vld [vmem:[#allocation5 + $0x258] sm:$0xff]
    %v174 = vld [vmem:[#allocation5 + $0x260] sm:$0xff]
    %v175 = vld [vmem:[#allocation5 + $0x268] sm:$0xff]
    %v176 = vld [vmem:[#allocation5 + $0x270] sm:$0xff]
    %v177 = vld [vmem:[#allocation5 + $0x278] sm:$0xff]
    %v178 = vld [vmem:[#allocation5 + $0x280] sm:$0xff]
    %v179 = vld [vmem:[#allocation5 + $0x288] sm:$0xff]
    %v180 = vld [vmem:[#allocation5 + $0x290] sm:$0xff]
    %v181 = vld [vmem:[#allocation5 + $0x298] sm:$0xff]
    %v182 = vld [vmem:[#allocation5 + $0x2a0] sm:$0xff]
    %v183 = vld [vmem:[#allocation5 + $0x2a8] sm:$0xff]
    %v184 = vld [vmem:[#allocation5 + $0x2b0] sm:$0xff]
    %v185 = vld [vmem:[#allocation5 + $0x2b8] sm:$0xff]
    %v186 = vld [vmem:[#allocation5 + $0x2c0] sm:$0xff]
    %v187 = vld [vmem:[#allocation5 + $0x2c8] sm:$0xff]
    %v188 = vld [vmem:[#allocation5 + $0x2d0] sm:$0xff]
    %v189 = vld [vmem:[#allocation5 + $0x2d8] sm:$0xff]
    %v190 = vld [vmem:[#allocation5 + $0x2e0] sm:$0xff]
    %v191 = vld [vmem:[#allocation5 + $0x2e8] sm:$0xff]
    %v192 = vld [vmem:[#allocation5 + $0x2f0] sm:$0xff]
    %v193 = vld [vmem:[#allocation5 + $0x2f8] sm:$0xff]
    %v196 = vunpack.c.l.b16 %v96
    %v197 = vunpack.c.h.b16 %v96
    %v198 = vunpack.c.l.b16 %v97
    %v199 = vpack.c.b16 %v196, %v196
    %v200 = vpack.c.b16 %v197, %v197
    %v201 = vpack.c.b16 %v198, %v198
    %v301 = vunpack.c.l.b16 %v98
    %v302 = vunpack.c.h.b16 %v98
    %v303 = vunpack.c.l.b16 %v99
    %v304 = vunpack.c.h.b16 %v99
    %v305 = vunpack.c.l.b16 %v100
    %v306 = vunpack.c.h.b16 %v100
    %v307 = vunpack.c.l.b16 %v101
    %v308 = vunpack.c.h.b16 %v101
    %v309 = vunpack.c.l.b16 %v102
    %v310 = vunpack.c.h.b16 %v102
    %v311 = vunpack.c.l.b16 %v103
    %v312 = vunpack.c.h.b16 %v103
    %v313 = vunpack.c.l.b16 %v104
    %v314 = vunpack.c.h.b16 %v104
    %v315 = vunpack.c.l.b16 %v105
    %v316 = vunpack.c.h.b16 %v105
    %v317 = vunpack.c.l.b16 %v106
    %v318 = vunpack.c.h.b16 %v106
    %v319 = vunpack.c.l.b16 %v107
    %v320 = vunpack.c.h.b16 %v107
    %v321 = vunpack.c.l.b16 %v108
    %v322 = vunpack.c.h.b16 %v108
    %v323 = vunpack.c.l.b16 %v109
    %v324 = vunpack.c.h.b16 %v109
    %v325 = vunpack.c.l.b16 %v110
    %v326 = vunpack.c.h.b16 %v110
    %v327 = vunpack.c.l.b16 %v111
    %v328 = vunpack.c.h.b16 %v111
    %v329 = vunpack.c.l.b16 %v112
    %v330 = vunpack.c.h.b16 %v112
    %v331 = vunpack.c.l.b16 %v113
    %v332 = vunpack.c.h.b16 %v113
    %v333 = vunpack.c.l.b16 %v114
    %v334 = vunpack.c.h.b16 %v114
    %v335 = vunpack.c.l.b16 %v115
    %v336 = vunpack.c.h.b16 %v115
    %v337 = vunpack.c.l.b16 %v116
    %v338 = vunpack.c.h.b16 %v116
    %v339 = vunpack.c.l.b16 %v117
    %v340 = vunpack.c.h.b16 %v117
    %v341 = vunpack.c.l.b16 %v118
    %v342 = vunpack.c.h.b16 %v118
    %v343 = vunpack.c.l.b16 %v119
    %v344 = vunpack.c.h.b16 %v119
    %v345 = vunpack.c.l.b16 %v120
    %v346 = vunpack.c.h.b16 %v120
    %v347 = vunpack.c.l.b16 %v121
    %v348 = vunpack.c.h.b16 %v121
    %v349 = vunpack.c.l.b16 %v122
    %v350 = vunpack.c.h.b16 %v122
    %v351 = vunpack.c.l.b16 %v123
    %v352 = vunpack.c.h.b16 %v123
    %v353 = vunpack.c.l.b16 %v124
    %v354 = vunpack.c.h.b16 %v124
    %v355 = vunpack.c.l.b16 %v125
    %v356 = vunpack.c.h.b16 %v125
    %v357 = vunpack.c.l.b16 %v126
    %v358 = vunpack.c.h.b16 %v126
    %v359 = vunpack.c.l.b16 %v127
    %v360 = vunpack.c.h.b16 %v127
    %v361 = vunpack.c.l.b16 %v128
    %v362 = vunpack.c.h.b16 %v128
    %v363 = vunpack.c.l.b16 %v129
    %v364 = vunpack.c.h.b16 %v129
    %v365 = vunpack.c.l.b16 %v130
    %v366 = vunpack.c.h.b16 %v130
    %v367 = vunpack.c.l.b16 %v131
    %v368 = vunpack.c.h.b16 %v131
    %v369 = vunpack.c.l.b16 %v132
    %v370 = vunpack.c.h.b16 %v132
    %v371 = vunpack.c.l.b16 %v133
    %v372 = vunpack.c.h.b16 %v133
    %v373 = vunpack.c.l.b16 %v134
    %v374 = vunpack.c.h.b16 %v134
    %v375 = vunpack.c.l.b16 %v135
    %v376 = vunpack.c.h.b16 %v135
    %v377 = vunpack.c.l.b16 %v136
    %v378 = vunpack.c.h.b16 %v136
    %v379 = vunpack.c.l.b16 %v137
    %v380 = vunpack.c.h.b16 %v137
    %v381 = vunpack.c.l.b16 %v138
    %v382 = vunpack.c.h.b16 %v138
    %v383 = vunpack.c.l.b16 %v139
    %v384 = vunpack.c.h.b16 %v139
    %v385 = vunpack.c.l.b16 %v140
    %v386 = vunpack.c.h.b16 %v140
    %v387 = vunpack.c.l.b16 %v141
    %v388 = vunpack.c.h.b16 %v141
    %v389 = vunpack.c.l.b16 %v142
    %v390 = vunpack.c.h.b16 %v142
    %v391 = vunpack.c.l.b16 %v143
    %v392 = vunpack.c.h.b16 %v143
    %v393 = vunpack.c.l.b16 %v144
    %v394 = vunpack.c.h.b16 %v144
    %v395 = vunpack.c.l.b16 %v145
    %v396 = vunpack.c.h.b16 %v145
    %v397 = vunpack.c.l.b16 %v146
    %v398 = vunpack.c.h.b16 %v146
    %v399 = vunpack.c.l.b16 %v147
    %v400 = vunpack.c.h.b16 %v147
    %v401 = vunpack.c.l.b16 %v148
    %v402 = vunpack.c.h.b16 %v148
    %v403 = vunpack.c.l.b16 %v149
    %v404 = vunpack.c.h.b16 %v149
    %v405 = vunpack.c.l.b16 %v150
    %v406 = vunpack.c.h.b16 %v150
    %v407 = vunpack.c.l.b16 %v151
    %v408 = vunpack.c.h.b16 %v151
    %v409 = vunpack.c.l.b16 %v152
    %v410 = vunpack.c.h.b16 %v152
    %v411 = vunpack.c.l.b16 %v153
    %v412 = vunpack.c.h.b16 %v153
    %v413 = vunpack.c.l.b16 %v154
    %v414 = vunpack.c.h.b16 %v154
    %v415 = vunpack.c.l.b16 %v155
    %v416 = vunpack.c.h.b16 %v155
    %v417 = vunpack.c.l.b16 %v156
    %v418 = vunpack.c.h.b16 %v156
    %v419 = vunpack.c.l.b16 %v157
    %v420 = vunpack.c.h.b16 %v157
    %v421 = vunpack.c.l.b16 %v158
    %v422 = vunpack.c.h.b16 %v158
    %v423 = vunpack.c.l.b16 %v159
    %v424 = vunpack.c.h.b16 %v159
    %v425 = vunpack.c.l.b16 %v160
    %v426 = vunpack.c.h.b16 %v160
    %v427 = vunpack.c.l.b16 %v161
    %v428 = vunpack.c.h.b16 %v161
    %v429 = vunpack.c.l.b16 %v162
    %v430 = vunpack.c.h.b16 %v162
    %v431 = vunpack.c.l.b16 %v163
    %v432 = vunpack.c.h.b16 %v163
    %v433 = vunpack.c.l.b16 %v164
    %v434 = vunpack.c.h.b16 %v164
    %v435 = vunpack.c.l.b16 %v165
    %v436 = vunpack.c.h.b16 %v165
    %v437 = vunpack.c.l.b16 %v166
    %v438 = vunpack.c.h.b16 %v166
    %v439 = vunpack.c.l.b16 %v167
    %v440 = vunpack.c.h.b16 %v167
    %v441 = vunpack.c.l.b16 %v168
    %v442 = vunpack.c.h.b16 %v168
    %v443 = vunpack.c.l.b16 %v169
    %v444 = vunpack.c.h.b16 %v169
    %v445 = vunpack.c.l.b16 %v170
    %v446 = vunpack.c.h.b16 %v170
    %v447 = vunpack.c.l.b16 %v171
    %v448 = vunpack.c.h.b16 %v171
    %v449 = vunpack.c.l.b16 %v172
    %v450 = vunpack.c.h.b16 %v172
    %v451 = vunpack.c.l.b16 %v173
    %v452 = vunpack.c.h.b16 %v173
    %v453 = vunpack.c.l.b16 %v174
    %v454 = vunpack.c.h.b16 %v174
    %v455 = vunpack.c.l.b16 %v175
    %v456 = vunpack.c.h.b16 %v175
    %v457 = vunpack.c.l.b16 %v176
    %v458 = vunpack.c.h.b16 %v176
    %v459 = vunpack.c.l.b16 %v177
    %v460 = vunpack.c.h.b16 %v177
    %v461 = vunpack.c.l.b16 %v178
    %v462 = vunpack.c.h.b16 %v178
    %v463 = vunpack.c.l.b16 %v179
    %v464 = vunpack.c.h.b16 %v179
    %v465 = vunpack.c.l.b16 %v180
    %v466 = vunpack.c.h.b16 %v180
    %v467 = vunpack.c.l.b16 %v181
    %v468 = vunpack.c.h.b16 %v181
    %v469 = vunpack.c.l.b16 %v182
    %v470 = vunpack.c.h.b16 %v182
    %v471 = vunpack.c.l.b16 %v183
    %v472 = vunpack.c.h.b16 %v183
    %v473 = vunpack.c.l.b16 %v184
    %v474 = vunpack.c.h.b16 %v184
    %v475 = vunpack.c.l.b16 %v185
    %v476 = vunpack.c.h.b16 %v185
    %v477 = vunpack.c.l.b16 %v186
    %v478 = vunpack.c.h.b16 %v186
    %v479 = vunpack.c.l.b16 %v187
    %v480 = vunpack.c.h.b16 %v187
    %v481 = vunpack.c.l.b16 %v188
    %v482 = vunpack.c.h.b16 %v188
    %v483 = vunpack.c.l.b16 %v189
    %v484 = vunpack.c.h.b16 %v189
    %v485 = vunpack.c.l.b16 %v190
    %v486 = vunpack.c.h.b16 %v190
    %v487 = vunpack.c.l.b16 %v191
    %v488 = vunpack.c.h.b16 %v191
    %v489 = vunpack.c.l.b16 %v192
    %v490 = vunpack.c.h.b16 %v192
    %v491 = vunpack.c.l.b16 %v193
    %v492 = vunpack.c.h.b16 %v193
    %v493 = vpack.c.b16 %v305, %v301
    %v494 = vpack.c.b16 %v306, %v302
    %v495 = vpack.c.b16 %v307, %v303
    %v496 = vpack.c.b16 %v308, %v304
    %v497 = vpack.c.b16 %v313, %v309
    %v498 = vpack.c.b16 %v314, %v310
    %v499 = vpack.c.b16 %v315, %v311
    %v500 = vpack.c.b16 %v316, %v312
    %v501 = vpack.c.b16 %v321, %v317
    %v502 = vpack.c.b16 %v322, %v318
    %v503 = vpack.c.b16 %v323, %v319
    %v504 = vpack.c.b16 %v324, %v320
    %v505 = vpack.c.b16 %v329, %v325
    %v506 = vpack.c.b16 %v330, %v326
    %v507 = vpack.c.b16 %v331, %v327
    %v508 = vpack.c.b16 %v332, %v328
    %v509 = vpack.c.b16 %v337, %v333
    %v510 = vpack.c.b16 %v338, %v334
    %v511 = vpack.c.b16 %v339, %v335
    %v512 = vpack.c.b16 %v340, %v336
    %v513 = vpack.c.b16 %v345, %v341
    %v514 = vpack.c.b16 %v346, %v342
    %v515 = vpack.c.b16 %v347, %v343
    %v516 = vpack.c.b16 %v348, %v344
    %v517 = vpack.c.b16 %v353, %v349
    %v518 = vpack.c.b16 %v354, %v350
    %v519 = vpack.c.b16 %v355, %v351
    %v520 = vpack.c.b16 %v356, %v352
    %v521 = vpack.c.b16 %v361, %v357
    %v522 = vpack.c.b16 %v362, %v358
    %v523 = vpack.c.b16 %v363, %v359
    %v524 = vpack.c.b16 %v364, %v360
    %v525 = vpack.c.b16 %v369, %v365
    %v526 = vpack.c.b16 %v370, %v366
    %v527 = vpack.c.b16 %v371, %v367
    %v528 = vpack.c.b16 %v372, %v368
    %v529 = vpack.c.b16 %v377, %v373
    %v530 = vpack.c.b16 %v378, %v374
    %v531 = vpack.c.b16 %v379, %v375
    %v532 = vpack.c.b16 %v380, %v376
    %v533 = vpack.c.b16 %v385, %v381
    %v534 = vpack.c.b16 %v386, %v382
    %v535 = vpack.c.b16 %v387, %v383
    %v536 = vpack.c.b16 %v388, %v384
    %v537 = vpack.c.b16 %v393, %v389
    %v538 = vpack.c.b16 %v394, %v390
    %v539 = vpack.c.b16 %v395, %v391
    %v540 = vpack.c.b16 %v396, %v392
    %v541 = vpack.c.b16 %v401, %v397
    %v542 = vpack.c.b16 %v402, %v398
    %v543 = vpack.c.b16 %v403, %v399
    %v544 = vpack.c.b16 %v404, %v400
    %v545 = vpack.c.b16 %v409, %v405
    %v546 = vpack.c.b16 %v410, %v406
    %v547 = vpack.c.b16 %v411, %v407
    %v548 = vpack.c.b16 %v412, %v408
    %v549 = vpack.c.b16 %v417, %v413
    %v550 = vpack.c.b16 %v418, %v414
    %v551 = vpack.c.b16 %v419, %v415
    %v552 = vpack.c.b16 %v420, %v416
    %v553 = vpack.c.b16 %v425, %v421
    %v554 = vpack.c.b16 %v426, %v422
    %v555 = vpack.c.b16 %v427, %v423
    %v556 = vpack.c.b16 %v428, %v424
    %v557 = vpack.c.b16 %v433, %v429
    %v558 = vpack.c.b16 %v434, %v430
    %v559 = vpack.c.b16 %v435, %v431
    %v560 = vpack.c.b16 %v436, %v432
    %v561 = vpack.c.b16 %v441, %v437
    %v562 = vpack.c.b16 %v442, %v438
    %v563 = vpack.c.b16 %v443, %v439
    %v564 = vpack.c.b16 %v444, %v440
    %v565 = vpack.c.b16 %v449, %v445
    %v566 = vpack.c.b16 %v450, %v446
    %v567 = vpack.c.b16 %v451, %v447
    %v568 = vpack.c.b16 %v452, %v448
    %v569 = vpack.c.b16 %v457, %v453
    %v570 = vpack.c.b16 %v458, %v454
    %v571 = vpack.c.b16 %v459, %v455
    %v572 = vpack.c.b16 %v460, %v456
    %v573 = vpack.c.b16 %v465, %v461
    %v574 = vpack.c.b16 %v466, %v462
    %v575 = vpack.c.b16 %v467, %v463
    %v576 = vpack.c.b16 %v468, %v464
    %v577 = vpack.c.b16 %v473, %v469
    %v578 = vpack.c.b16 %v474, %v470
    %v579 = vpack.c.b16 %v475, %v471
    %v580 = vpack.c.b16 %v476, %v472
    %v581 = vpack.c.b16 %v481, %v477
    %v582 = vpack.c.b16 %v482, %v478
    %v583 = vpack.c.b16 %v483, %v479
    %v584 = vpack.c.b16 %v484, %v480
    %v585 = vpack.c.b16 %v489, %v485
    %v586 = vpack.c.b16 %v490, %v486
    %v587 = vpack.c.b16 %v491, %v487
    %v588 = vpack.c.b16 %v492, %v488
    %685 = vmatpush.bf16.msra.mxu0 %v521
    %686 = vmatpush.bf16.msra.mxu0 %v517
    %687 = vmatpush.bf16.msra.mxu0 %v513
    %688 = vmatpush.bf16.msra.mxu0 %v509
    %689 = vmatpush.bf16.msra.mxu0 %v505
    %690 = vmatpush.bf16.msra.mxu0 %v501
    %691 = vmatpush.bf16.msra.mxu0 %v497
    %692 = vmatpush.bf16.msra.mxu0 %v493
    %693 = vmatmul.bf16.gmra.mxu0 %v199
    %v694 = vpop.f32.mrf.mxu0
    %v695 = vadd.f32 0.0, %v694
    %v696 = vpop.f32.mrf.mxu0
    %697 = vdwg.mxu0
    %698 = vmatpush.bf16.msra.mxu0 %v553
    %699 = vmatpush.bf16.msra.mxu0 %v549
    %700 = vmatpush.bf16.msra.mxu0 %v545
    %701 = vmatpush.bf16.msra.mxu0 %v541
    %702 = vmatpush.bf16.msra.mxu0 %v537
    %703 = vmatpush.bf16.msra.mxu0 %v533
    %704 = vmatpush.bf16.msra.mxu0 %v529
    %705 = vmatpush.bf16.msra.mxu0 %v525
    %706 = vmatmul.bf16.gmra.mxu0 %v200
    %v707 = vpop.f32.mrf.mxu0
    %v708 = vadd.f32 %v695, %v707
    %v709 = vpop.f32.mrf.mxu0
    %710 = vdwg.mxu0
    %711 = vmatpush.bf16.msra.mxu0 %v585
    %712 = vmatpush.bf16.msra.mxu0 %v581
    %713 = vmatpush.bf16.msra.mxu0 %v577
    %714 = vmatpush.bf16.msra.mxu0 %v573
    %715 = vmatpush.bf16.msra.mxu0 %v569
    %716 = vmatpush.bf16.msra.mxu0 %v565
    %717 = vmatpush.bf16.msra.mxu0 %v561
    %718 = vmatpush.bf16.msra.mxu0 %v557
    %719 = vmatmul.bf16.gmra.mxu0 %v201
    %v720 = vpop.f32.mrf.mxu0
    %v721 = vadd.f32 %v708, %v720
    %v722 = vpop.f32.mrf.mxu0
    %723 = vdwg.mxu0
    %724 = vmatpush.bf16.msra.mxu0 %v522
    %725 = vmatpush.bf16.msra.mxu0 %v518
    %726 = vmatpush.bf16.msra.mxu0 %v514
    %727 = vmatpush.bf16.msra.mxu0 %v510
    %728 = vmatpush.bf16.msra.mxu0 %v506
    %729 = vmatpush.bf16.msra.mxu0 %v502
    %730 = vmatpush.bf16.msra.mxu0 %v498
    %731 = vmatpush.bf16.msra.mxu0 %v494
    %732 = vmatmul.bf16.gmra.mxu0 %v199
    %v733 = vpop.f32.mrf.mxu0
    %v734 = vadd.f32 0.0, %v733
    %v735 = vpop.f32.mrf.mxu0
    %736 = vdwg.mxu0
    %737 = vmatpush.bf16.msra.mxu0 %v554
    %738 = vmatpush.bf16.msra.mxu0 %v550
    %739 = vmatpush.bf16.msra.mxu0 %v546
    %740 = vmatpush.bf16.msra.mxu0 %v542
    %741 = vmatpush.bf16.msra.mxu0 %v538
    %742 = vmatpush.bf16.msra.mxu0 %v534
    %743 = vmatpush.bf16.msra.mxu0 %v530
    %744 = vmatpush.bf16.msra.mxu0 %v526
    %745 = vmatmul.bf16.gmra.mxu0 %v200
    %v746 = vpop.f32.mrf.mxu0
    %v747 = vadd.f32 %v734, %v746
    %v748 = vpop.f32.mrf.mxu0
    %749 = vdwg.mxu0
    %750 = vmatpush.bf16.msra.mxu0 %v586
    %751 = vmatpush.bf16.msra.mxu0 %v582
    %752 = vmatpush.bf16.msra.mxu0 %v578
    %753 = vmatpush.bf16.msra.mxu0 %v574
    %754 = vmatpush.bf16.msra.mxu0 %v570
    %755 = vmatpush.bf16.msra.mxu0 %v566
    %756 = vmatpush.bf16.msra.mxu0 %v562
    %757 = vmatpush.bf16.msra.mxu0 %v558
    %758 = vmatmul.bf16.gmra.mxu0 %v201
    %v759 = vpop.f32.mrf.mxu0
    %v760 = vadd.f32 %v747, %v759
    %v761 = vpop.f32.mrf.mxu0
    %762 = vdwg.mxu0
    %763 = vmatpush.bf16.msra.mxu0 %v523
    %764 = vmatpush.bf16.msra.mxu0 %v519
    %765 = vmatpush.bf16.msra.mxu0 %v515
    %766 = vmatpush.bf16.msra.mxu0 %v511
    %767 = vmatpush.bf16.msra.mxu0 %v507
    %768 = vmatpush.bf16.msra.mxu0 %v503
    %769 = vmatpush.bf16.msra.mxu0 %v499
    %770 = vmatpush.bf16.msra.mxu0 %v495
    %771 = vmatmul.bf16.gmra.mxu0 %v199
    %v772 = vpop.f32.mrf.mxu0
    %v773 = vadd.f32 0.0, %v772
    %v774 = vpop.f32.mrf.mxu0
    %775 = vdwg.mxu0
    %776 = vmatpush.bf16.msra.mxu0 %v555
    %777 = vmatpush.bf16.msra.mxu0 %v551
    %778 = vmatpush.bf16.msra.mxu0 %v547
    %779 = vmatpush.bf16.msra.mxu0 %v543
    %780 = vmatpush.bf16.msra.mxu0 %v539
    %781 = vmatpush.bf16.msra.mxu0 %v535
    %782 = vmatpush.bf16.msra.mxu0 %v531
    %783 = vmatpush.bf16.msra.mxu0 %v527
    %784 = vmatmul.bf16.gmra.mxu0 %v200
    %v785 = vpop.f32.mrf.mxu0
    %v786 = vadd.f32 %v773, %v785
    %v787 = vpop.f32.mrf.mxu0
    %788 = vdwg.mxu0
    %789 = vmatpush.bf16.msra.mxu0 %v587
    %790 = vmatpush.bf16.msra.mxu0 %v583
    %791 = vmatpush.bf16.msra.mxu0 %v579
    %792 = vmatpush.bf16.msra.mxu0 %v575
    %793 = vmatpush.bf16.msra.mxu0 %v571
    %794 = vmatpush.bf16.msra.mxu0 %v567
    %795 = vmatpush.bf16.msra.mxu0 %v563
    %796 = vmatpush.bf16.msra.mxu0 %v559
    %797 = vmatmul.bf16.gmra.mxu0 %v201
    %v798 = vpop.f32.mrf.mxu0
    %v799 = vadd.f32 %v786, %v798
    %v800 = vpop.f32.mrf.mxu0
    %801 = vdwg.mxu0
    %802 = vmatpush.bf16.msra.mxu0 %v524
    %803 = vmatpush.bf16.msra.mxu0 %v520
    %804 = vmatpush.bf16.msra.mxu0 %v516
    %805 = vmatpush.bf16.msra.mxu0 %v512
    %806 = vmatpush.bf16.msra.mxu0 %v508
    %807 = vmatpush.bf16.msra.mxu0 %v504
    %808 = vmatpush.bf16.msra.mxu0 %v500
    %809 = vmatpush.bf16.msra.mxu0 %v496
    %810 = vmatmul.bf16.gmra.mxu0 %v199
    %v811 = vpop.f32.mrf.mxu0
    %v812 = vadd.f32 0.0, %v811
    %v813 = vpop.f32.mrf.mxu0
    %814 = vdwg.mxu0
    %815 = vmatpush.bf16.msra.mxu0 %v556
    %816 = vmatpush.bf16.msra.mxu0 %v552
    %817 = vmatpush.bf16.msra.mxu0 %v548
    %818 = vmatpush.bf16.msra.mxu0 %v544
    %819 = vmatpush.bf16.msra.mxu0 %v540
    %820 = vmatpush.bf16.msra.mxu0 %v536
    %821 = vmatpush.bf16.msra.mxu0 %v532
    %822 = vmatpush.bf16.msra.mxu0 %v528
    %823 = vmatmul.bf16.gmra.mxu0 %v200
    %v824 = vpop.f32.mrf.mxu0
    %v825 = vadd.f32 %v812, %v824
    %v826 = vpop.f32.mrf.mxu0
    %827 = vdwg.mxu0
    %828 = vmatpush.bf16.msra.mxu0 %v588
    %829 = vmatpush.bf16.msra.mxu0 %v584
    %830 = vmatpush.bf16.msra.mxu0 %v580
    %831 = vmatpush.bf16.msra.mxu0 %v576
    %832 = vmatpush.bf16.msra.mxu0 %v572
    %833 = vmatpush.bf16.msra.mxu0 %v568
    %834 = vmatpush.bf16.msra.mxu0 %v564
    %835 = vmatpush.bf16.msra.mxu0 %v560
    %836 = vmatmul.bf16.gmra.mxu0 %v201
    %v837 = vpop.f32.mrf.mxu0
    %v838 = vadd.f32 %v825, %v837
    %v839 = vpop.f32.mrf.mxu0
    %840 = vdwg.mxu0
    %v841 = vperm.slane %v95, 0
    %v842 = vmul.f32 %v721, %v841
    %v843 = vperm.slane %v95, 1
    %v844 = vadd.f32 %v842, %v843
    %v845 = vmax.f32 %v844, 0.0
    %v846 = vmul.f32 %v760, %v841
    %v847 = vadd.f32 %v846, %v843
    %v848 = vmax.f32 %v847, 0.0
    %v849 = vmax.f32 %v845, %v848
    %v850 = vmul.f32 %v799, %v841
    %v851 = vadd.f32 %v850, %v843
    %v852 = vmax.f32 %v851, 0.0
    %v853 = vmax.f32 %v849, %v852
    %v854 = vmul.f32 %v838, %v841
    %v855 = vadd.f32 %v854, %v843
    %v856 = vmax.f32 %v855, 0.0
    %v857 = vmax.f32 %v853, %v856
    %v858 = vpack.c.bf16 %v857, %v857
    %v859 = vld [vmem:[#allocation7] sm:$0xff]
    %v860 = vld [vmem:[#allocation7 + $0x8] sm:$0xff]
    %v861 = vld [vmem:[#allocation7 + $0x10] sm:$0xff]
    %v862 = vld [vmem:[#allocation7 + $0x18] sm:$0xff]
    %v863 = vld [vmem:[#allocation7 + $0x20] sm:$0xff]
    %v864 = vld [vmem:[#allocation7 + $0x28] sm:$0xff]
    %v865 = vld [vmem:[#allocation7 + $0x30] sm:$0xff]
    %v866 = vld [vmem:[#allocation7 + $0x38] sm:$0xff]
    %v867 = vld [vmem:[#allocation7 + $0x40] sm:$0xff]
    %v868 = vld [vmem:[#allocation7 + $0x48] sm:$0xff]
    %v869 = vld [vmem:[#allocation7 + $0x50] sm:$0xff]
    %v870 = vld [vmem:[#allocation7 + $0x58] sm:$0xff]
    %v871 = vld [vmem:[#allocation7 + $0x60] sm:$0xff]
    %v872 = vld [vmem:[#allocation7 + $0x68] sm:$0xff]
    %v873 = vld [vmem:[#allocation7 + $0x70] sm:$0xff]
    %v874 = vld [vmem:[#allocation7 + $0x78] sm:$0xff]
    %v875 = vld [vmem:[#allocation7 + $0x80] sm:$0xff]
    %v876 = vld [vmem:[#allocation7 + $0x88] sm:$0xff]
    %v877 = vld [vmem:[#allocation7 + $0x90] sm:$0xff]
    %v878 = vld [vmem:[#allocation7 + $0x98] sm:$0xff]
    %v879 = vld [vmem:[#allocation7 + $0xa0] sm:$0xff]
    %v880 = vld [vmem:[#allocation7 + $0xa8] sm:$0xff]
    %v881 = vld [vmem:[#allocation7 + $0xb0] sm:$0xff]
    %v882 = vld [vmem:[#allocation7 + $0xb8] sm:$0xff]
    %v883 = vld [vmem:[#allocation7 + $0xc0] sm:$0xff]
    %v884 = vld [vmem:[#allocation7 + $0xc8] sm:$0xff]
    %v885 = vld [vmem:[#allocation7 + $0xd0] sm:$0xff]
    %v886 = vld [vmem:[#allocation7 + $0xd8] sm:$0xff]
    %v887 = vld [vmem:[#allocation7 + $0xe0] sm:$0xff]
    %v888 = vld [vmem:[#allocation7 + $0xe8] sm:$0xff]
    %v889 = vld [vmem:[#allocation7 + $0xf0] sm:$0xff]
    %v890 = vld [vmem:[#allocation7 + $0xf8] sm:$0xff]
    %v923 = vunpack.c.l.b16 %v859
    %v924 = vunpack.c.h.b16 %v859
    %v925 = vunpack.c.l.b16 %v860
    %v926 = vunpack.c.h.b16 %v860
    %v927 = vunpack.c.l.b16 %v861
    %v928 = vunpack.c.h.b16 %v861
    %v929 = vunpack.c.l.b16 %v862
    %v930 = vunpack.c.h.b16 %v862
    %v931 = vunpack.c.l.b16 %v863
    %v932 = vunpack.c.h.b16 %v863
    %v933 = vunpack.c.l.b16 %v864
    %v934 = vunpack.c.h.b16 %v864
    %v935 = vunpack.c.l.b16 %v865
    %v936 = vunpack.c.h.b16 %v865
    %v937 = vunpack.c.l.b16 %v866
    %v938 = vunpack.c.h.b16 %v866
    %v939 = vunpack.c.l.b16 %v867
    %v940 = vunpack.c.h.b16 %v867
    %v941 = vunpack.c.l.b16 %v868
    %v942 = vunpack.c.h.b16 %v868
    %v943 = vunpack.c.l.b16 %v869
    %v944 = vunpack.c.h.b16 %v869
    %v945 = vunpack.c.l.b16 %v870
    %v946 = vunpack.c.h.b16 %v870
    %v947 = vunpack.c.l.b16 %v871
    %v948 = vunpack.c.h.b16 %v871
    %v949 = vunpack.c.l.b16 %v872
    %v950 = vunpack.c.h.b16 %v872
    %v951 = vunpack.c.l.b16 %v873
    %v952 = vunpack.c.h.b16 %v873
    %v953 = vunpack.c.l.b16 %v874
    %v954 = vunpack.c.h.b16 %v874
    %v955 = vunpack.c.l.b16 %v875
    %v956 = vunpack.c.h.b16 %v875
    %v957 = vunpack.c.l.b16 %v876
    %v958 = vunpack.c.h.b16 %v876
    %v959 = vunpack.c.l.b16 %v877
    %v960 = vunpack.c.h.b16 %v877
    %v961 = vunpack.c.l.b16 %v878
    %v962 = vunpack.c.h.b16 %v878
    %v963 = vunpack.c.l.b16 %v879
    %v964 = vunpack.c.h.b16 %v879
    %v965 = vunpack.c.l.b16 %v880
    %v966 = vunpack.c.h.b16 %v880
    %v967 = vunpack.c.l.b16 %v881
    %v968 = vunpack.c.h.b16 %v881
    %v969 = vunpack.c.l.b16 %v882
    %v970 = vunpack.c.h.b16 %v882
    %v971 = vunpack.c.l.b16 %v883
    %v972 = vunpack.c.h.b16 %v883
    %v973 = vunpack.c.l.b16 %v884
    %v974 = vunpack.c.h.b16 %v884
    %v975 = vunpack.c.l.b16 %v885
    %v976 = vunpack.c.h.b16 %v885
    %v977 = vunpack.c.l.b16 %v886
    %v978 = vunpack.c.h.b16 %v886
    %v979 = vunpack.c.l.b16 %v887
    %v980 = vunpack.c.h.b16 %v887
    %v981 = vunpack.c.l.b16 %v888
    %v982 = vunpack.c.h.b16 %v888
    %v983 = vunpack.c.l.b16 %v889
    %v984 = vunpack.c.h.b16 %v889
    %v985 = vunpack.c.l.b16 %v890
    %v986 = vunpack.c.h.b16 %v890
    %v987 = vpack.c.b16 %v927, %v923
    %v988 = vpack.c.b16 %v928, %v924
    %v989 = vpack.c.b16 %v929, %v925
    %v990 = vpack.c.b16 %v930, %v926
    %v991 = vpack.c.b16 %v935, %v931
    %v992 = vpack.c.b16 %v936, %v932
    %v993 = vpack.c.b16 %v937, %v933
    %v994 = vpack.c.b16 %v938, %v934
    %v995 = vpack.c.b16 %v943, %v939
    %v996 = vpack.c.b16 %v944, %v940
    %v997 = vpack.c.b16 %v945, %v941
    %v998 = vpack.c.b16 %v946, %v942
    %v999 = vpack.c.b16 %v951, %v947
    %v1000 = vpack.c.b16 %v952, %v948
    %v1001 = vpack.c.b16 %v953, %v949
    %v1002 = vpack.c.b16 %v954, %v950
    %v1003 = vpack.c.b16 %v959, %v955
    %v1004 = vpack.c.b16 %v960, %v956
    %v1005 = vpack.c.b16 %v961, %v957
    %v1006 = vpack.c.b16 %v962, %v958
    %v1007 = vpack.c.b16 %v967, %v963
    %v1008 = vpack.c.b16 %v968, %v964
    %v1009 = vpack.c.b16 %v969, %v965
    %v1010 = vpack.c.b16 %v970, %v966
    %v1011 = vpack.c.b16 %v975, %v971
    %v1012 = vpack.c.b16 %v976, %v972
    %v1013 = vpack.c.b16 %v977, %v973
    %v1014 = vpack.c.b16 %v978, %v974
    %v1015 = vpack.c.b16 %v983, %v979
    %v1016 = vpack.c.b16 %v984, %v980
    %v1017 = vpack.c.b16 %v985, %v981
    %v1018 = vpack.c.b16 %v986, %v982
    %1051 = vmatpush.bf16.msra.mxu0 %v1015
    %1052 = vmatpush.bf16.msra.mxu0 %v1011
    %1053 = vmatpush.bf16.msra.mxu0 %v1007
    %1054 = vmatpush.bf16.msra.mxu0 %v1003
    %1055 = vmatpush.bf16.msra.mxu0 %v999
    %1056 = vmatpush.bf16.msra.mxu0 %v995
    %1057 = vmatpush.bf16.msra.mxu0 %v991
    %1058 = vmatpush.bf16.msra.mxu0 %v987
    %1059 = vmatmul.bf16.gmra.mxu0 %v858
    %v1060 = vpop.f32.mrf.mxu0
    %v1061 = vadd.f32 0.0, %v1060
    %v1062 = vpop.f32.mrf.mxu0
    %1063 = vdwg.mxu0
    %1064 = vmatpush.bf16.msra.mxu0 %v1016
    %1065 = vmatpush.bf16.msra.mxu0 %v1012
    %1066 = vmatpush.bf16.msra.mxu0 %v1008
    %1067 = vmatpush.bf16.msra.mxu0 %v1004
    %1068 = vmatpush.bf16.msra.mxu0 %v1000
    %1069 = vmatpush.bf16.msra.mxu0 %v996
    %1070 = vmatpush.bf16.msra.mxu0 %v992
    %1071 = vmatpush.bf16.msra.mxu0 %v988
    %1072 = vmatmul.bf16.gmra.mxu0 %v858
    %v1073 = vpop.f32.mrf.mxu0
    %v1074 = vadd.f32 0.0, %v1073
    %v1075 = vpop.f32.mrf.mxu0
    %1076 = vdwg.mxu0
    %1077 = vmatpush.bf16.msra.mxu0 %v1017
    %1078 = vmatpush.bf16.msra.mxu0 %v1013
    %1079 = vmatpush.bf16.msra.mxu0 %v1009
    %1080 = vmatpush.bf16.msra.mxu0 %v1005
    %1081 = vmatpush.bf16.msra.mxu0 %v1001
    %1082 = vmatpush.bf16.msra.mxu0 %v997
    %1083 = vmatpush.bf16.msra.mxu0 %v993
    %1084 = vmatpush.bf16.msra.mxu0 %v989
    %1085 = vmatmul.bf16.gmra.mxu0 %v858
    %v1086 = vpop.f32.mrf.mxu0
    %v1087 = vadd.f32 0.0, %v1086
    %v1088 = vpop.f32.mrf.mxu0
    %1089 = vdwg.mxu0
    %1090 = vmatpush.bf16.msra.mxu0 %v1018
    %1091 = vmatpush.bf16.msra.mxu0 %v1014
    %1092 = vmatpush.bf16.msra.mxu0 %v1010
    %1093 = vmatpush.bf16.msra.mxu0 %v1006
    %1094 = vmatpush.bf16.msra.mxu0 %v1002
    %1095 = vmatpush.bf16.msra.mxu0 %v998
    %1096 = vmatpush.bf16.msra.mxu0 %v994
    %1097 = vmatpush.bf16.msra.mxu0 %v990
    %1098 = vmatmul.bf16.gmra.mxu0 %v858
    %v1099 = vpop.f32.mrf.mxu0
    %v1100 = vadd.f32 0.0, %v1099
    %v1101 = vpop.f32.mrf.mxu0
    %1102 = vdwg.mxu0
    %v1103 = vperm.slane %v95, 2
    %v1104 = vmul.f32 %v1061, %v1103
    %v1105 = vperm.slane %v95, 3
    %v1106 = vadd.f32 %v1104, %v1105
    %v1107 = vmax.f32 %v1106, 0.0
    %v1108 = vmul.f32 %v1074, %v1103
    %v1109 = vadd.f32 %v1108, %v1105
    %v1110 = vmax.f32 %v1109, 0.0
    %v1111 = vmax.f32 %v1107, %v1110
    %v1112 = vmul.f32 %v1087, %v1103
    %v1113 = vadd.f32 %v1112, %v1105
    %v1114 = vmax.f32 %v1113, 0.0
    %v1115 = vmax.f32 %v1111, %v1114
    %v1116 = vmul.f32 %v1100, %v1103
    %v1117 = vadd.f32 %v1116, %v1105
    %v1118 = vmax.f32 %v1117, 0.0
    %v1119 = vmax.f32 %v1115, %v1118
    %v1120 = vpack.c.bf16 %v1119, %v1119
    %v1121 = vld [vmem:[#allocation8] sm:$0xf]
    %v1122 = vld [vmem:[#allocation8 + $0x4] sm:$0xf]
    %v1123 = vld [vmem:[#allocation8 + $0x8] sm:$0xf]
    %v1124 = vld [vmem:[#allocation8 + $0xc] sm:$0xf]
    %v1125 = vld [vmem:[#allocation8 + $0x10] sm:$0xf]
    %v1126 = vld [vmem:[#allocation8 + $0x14] sm:$0xf]
    %v1127 = vld [vmem:[#allocation8 + $0x18] sm:$0xf]
    %v1128 = vld [vmem:[#allocation8 + $0x1c] sm:$0xf]
    %v1129 = vld [vmem:[#allocation8 + $0x20] sm:$0xf]
    %v1130 = vld [vmem:[#allocation8 + $0x24] sm:$0xf]
    %v1131 = vld [vmem:[#allocation8 + $0x28] sm:$0xf]
    %v1132 = vld [vmem:[#allocation8 + $0x2c] sm:$0xf]
    %v1133 = vld [vmem:[#allocation8 + $0x30] sm:$0xf]
    %v1134 = vld [vmem:[#allocation8 + $0x34] sm:$0xf]
    %v1135 = vld [vmem:[#allocation8 + $0x38] sm:$0xf]
    %v1136 = vld [vmem:[#allocation8 + $0x3c] sm:$0xf]
    %v1137 = vperm.slane %v95, 4
    %v1154 = vunpack.c.l.b16 %v1121
    %v1155 = vunpack.c.l.b16 %v1122
    %v1156 = vunpack.c.l.b16 %v1123
    %v1157 = vunpack.c.l.b16 %v1124
    %v1158 = vunpack.c.l.b16 %v1125
    %v1159 = vunpack.c.l.b16 %v1126
    %v1160 = vunpack.c.l.b16 %v1127
    %v1161 = vunpack.c.l.b16 %v1128
    %v1162 = vunpack.c.l.b16 %v1129
    %v1163 = vunpack.c.l.b16 %v1130
    %v1164 = vunpack.c.l.b16 %v1131
    %v1165 = vunpack.c.l.b16 %v1132
    %v1166 = vunpack.c.l.b16 %v1133
    %v1167 = vunpack.c.l.b16 %v1134
    %v1168 = vunpack.c.l.b16 %v1135
    %v1169 = vunpack.c.l.b16 %v1136
    %v1170 = vpack.c.b16 %v1155, %v1154
    %v1171 = vpack.c.b16 %v1157, %v1156
    %v1172 = vpack.c.b16 %v1159, %v1158
    %v1173 = vpack.c.b16 %v1161, %v1160
    %v1174 = vpack.c.b16 %v1163, %v1162
    %v1175 = vpack.c.b16 %v1165, %v1164
    %v1176 = vpack.c.b16 %v1167, %v1166
    %v1177 = vpack.c.b16 %v1169, %v1168
    %1186 = vmatpush.bf16.msra.mxu0 %v1177
    %1187 = vmatpush.bf16.msra.mxu0 %v1176
    %1188 = vmatpush.bf16.msra.mxu0 %v1175
    %1189 = vmatpush.bf16.msra.mxu0 %v1174
    %1190 = vmatpush.bf16.msra.mxu0 %v1173
    %1191 = vmatpush.bf16.msra.mxu0 %v1172
    %1192 = vmatpush.bf16.msra.mxu0 %v1171
    %1193 = vmatpush.bf16.msra.mxu0 %v1170
    %1194 = vmatmul.bf16.gmra.mxu0 %v1120
    %v1195 = vpop.f32.mrf.mxu0
    %v1196 = vadd.f32 %v1137, %v1195
    %v1197 = vpop.f32.mrf.mxu0
    %1198 = vdwg.mxu0
    %v1199 = vmax.f32 %v1196, 0.0
    %v1200 = vpack.c.bf16 %v1199, %v1199
    %s1201 = scalar_lea.vmem [#allocation8], 64
    %v1202 = vld [vmem:[%s1201] sm:$0xf]
    %v1203 = vld [vmem:[%s1201 + $0x4] sm:$0xf]
    %v1204 = vld [vmem:[%s1201 + $0x8] sm:$0xf]
    %v1205 = vld [vmem:[%s1201 + $0xc] sm:$0xf]
    %v1206 = vld [vmem:[%s1201 + $0x10] sm:$0xf]
    %v1207 = vld [vmem:[%s1201 + $0x14] sm:$0xf]
    %v1208 = vld [vmem:[%s1201 + $0x18] sm:$0xf]
    %v1209 = vld [vmem:[%s1201 + $0x1c] sm:$0xf]
    %v1210 = vld [vmem:[%s1201 + $0x20] sm:$0xf]
    %v1211 = vld [vmem:[%s1201 + $0x24] sm:$0xf]
    %v1212 = vld [vmem:[%s1201 + $0x28] sm:$0xf]
    %v1213 = vld [vmem:[%s1201 + $0x2c] sm:$0xf]
    %v1214 = vld [vmem:[%s1201 + $0x30] sm:$0xf]
    %v1215 = vld [vmem:[%s1201 + $0x34] sm:$0xf]
    %v1216 = vld [vmem:[%s1201 + $0x38] sm:$0xf]
    %v1217 = vld [vmem:[%s1201 + $0x3c] sm:$0xf]
    %v1218 = vperm.slane %v95, 5
    %v1235 = vunpack.c.l.b16 %v1202
    %v1236 = vunpack.c.l.b16 %v1203
    %v1237 = vunpack.c.l.b16 %v1204
    %v1238 = vunpack.c.l.b16 %v1205
    %v1239 = vunpack.c.l.b16 %v1206
    %v1240 = vunpack.c.l.b16 %v1207
    %v1241 = vunpack.c.l.b16 %v1208
    %v1242 = vunpack.c.l.b16 %v1209
    %v1243 = vunpack.c.l.b16 %v1210
    %v1244 = vunpack.c.l.b16 %v1211
    %v1245 = vunpack.c.l.b16 %v1212
    %v1246 = vunpack.c.l.b16 %v1213
    %v1247 = vunpack.c.l.b16 %v1214
    %v1248 = vunpack.c.l.b16 %v1215
    %v1249 = vunpack.c.l.b16 %v1216
    %v1250 = vunpack.c.l.b16 %v1217
    %v1251 = vpack.c.b16 %v1236, %v1235
    %v1252 = vpack.c.b16 %v1238, %v1237
    %v1253 = vpack.c.b16 %v1240, %v1239
    %v1254 = vpack.c.b16 %v1242, %v1241
    %v1255 = vpack.c.b16 %v1244, %v1243
    %v1256 = vpack.c.b16 %v1246, %v1245
    %v1257 = vpack.c.b16 %v1248, %v1247
    %v1258 = vpack.c.b16 %v1250, %v1249
    %1267 = vmatpush.bf16.msra.mxu0 %v1258
    %1268 = vmatpush.bf16.msra.mxu0 %v1257
    %1269 = vmatpush.bf16.msra.mxu0 %v1256
    %1270 = vmatpush.bf16.msra.mxu0 %v1255
    %1271 = vmatpush.bf16.msra.mxu0 %v1254
    %1272 = vmatpush.bf16.msra.mxu0 %v1253
    %1273 = vmatpush.bf16.msra.mxu0 %v1252
    %1274 = vmatpush.bf16.msra.mxu0 %v1251
    %1275 = vmatmul.bf16.gmra.mxu0 %v1200
    %v1276 = vpop.f32.mrf.mxu0
    %v1277 = vadd.f32 %v1218, %v1276
    %v1278 = vpop.f32.mrf.mxu0
    %1279 = vdwg.mxu0
    %v1280 = vmax.f32 %v1277, 0.0
    %v1281 = vpack.c.bf16 %v1280, %v1280
    %s1282 = scalar_lea.vmem [#allocation8], 128
    %v1283 = vld [vmem:[%s1282] sm:$0xf]
    %v1284 = vld [vmem:[%s1282 + $0x4] sm:$0xf]
    %v1285 = vld [vmem:[%s1282 + $0x8] sm:$0xf]
    %v1286 = vld [vmem:[%s1282 + $0xc] sm:$0xf]
    %v1287 = vld [vmem:[%s1282 + $0x10] sm:$0xf]
    %v1288 = vld [vmem:[%s1282 + $0x14] sm:$0xf]
    %v1289 = vld [vmem:[%s1282 + $0x18] sm:$0xf]
    %v1290 = vld [vmem:[%s1282 + $0x1c] sm:$0xf]
    %v1291 = vld [vmem:[%s1282 + $0x20] sm:$0xf]
    %v1292 = vld [vmem:[%s1282 + $0x24] sm:$0xf]
    %v1293 = vld [vmem:[%s1282 + $0x28] sm:$0xf]
    %v1294 = vld [vmem:[%s1282 + $0x2c] sm:$0xf]
    %v1295 = vld [vmem:[%s1282 + $0x30] sm:$0xf]
    %v1296 = vld [vmem:[%s1282 + $0x34] sm:$0xf]
    %v1297 = vld [vmem:[%s1282 + $0x38] sm:$0xf]
    %v1298 = vld [vmem:[%s1282 + $0x3c] sm:$0xf]
    %v1299 = vperm.slane %v95, 6
    %v1316 = vunpack.c.l.b16 %v1283
    %v1317 = vunpack.c.l.b16 %v1284
    %v1318 = vunpack.c.l.b16 %v1285
    %v1319 = vunpack.c.l.b16 %v1286
    %v1320 = vunpack.c.l.b16 %v1287
    %v1321 = vunpack.c.l.b16 %v1288
    %v1322 = vunpack.c.l.b16 %v1289
    %v1323 = vunpack.c.l.b16 %v1290
    %v1324 = vunpack.c.l.b16 %v1291
    %v1325 = vunpack.c.l.b16 %v1292
    %v1326 = vunpack.c.l.b16 %v1293
    %v1327 = vunpack.c.l.b16 %v1294
    %v1328 = vunpack.c.l.b16 %v1295
    %v1329 = vunpack.c.l.b16 %v1296
    %v1330 = vunpack.c.l.b16 %v1297
    %v1331 = vunpack.c.l.b16 %v1298
    %v1332 = vpack.c.b16 %v1317, %v1316
    %v1333 = vpack.c.b16 %v1319, %v1318
    %v1334 = vpack.c.b16 %v1321, %v1320
    %v1335 = vpack.c.b16 %v1323, %v1322
    %v1336 = vpack.c.b16 %v1325, %v1324
    %v1337 = vpack.c.b16 %v1327, %v1326
    %v1338 = vpack.c.b16 %v1329, %v1328
    %v1339 = vpack.c.b16 %v1331, %v1330
    %1348 = vmatpush.bf16.msra.mxu0 %v1339
    %1349 = vmatpush.bf16.msra.mxu0 %v1338
    %1350 = vmatpush.bf16.msra.mxu0 %v1337
    %1351 = vmatpush.bf16.msra.mxu0 %v1336
    %1352 = vmatpush.bf16.msra.mxu0 %v1335
    %1353 = vmatpush.bf16.msra.mxu0 %v1334
    %1354 = vmatpush.bf16.msra.mxu0 %v1333
    %1355 = vmatpush.bf16.msra.mxu0 %v1332
    %1356 = vmatmul.bf16.gmra.mxu0 %v1281
    %v1357 = vpop.f32.mrf.mxu0
    %v1358 = vadd.f32 %v1299, %v1357
    %v1359 = vpop.f32.mrf.mxu0
    %1360 = vdwg.mxu0
    %1361 = vst [vmem:[#allocation11] sm:$0xff] %v1358
    // Predicated region
    $region42: #{tpu_custom_call.1} parent=1 // pred_check
      _
    $region43: #{tpu_custom_call.1} parent=1 // pred_check_branch
      %1363 = sbr.rel (0) target = $region45
    $region44: #{tpu_custom_call.1} parent=1 // pred_region
      %1365 = vsyncadd [#allocation4], 0
      %s1367 = sshll.u32 [#allocation11], 4
      %s1368 = int_to_ptr.vmem [resolvable:$true] %s1367
      %s1369 = sshll.u32 %s5, 4
      %s1370 = int_to_ptr.hbm [resolvable:$true] %s1369
      %1372 = dma.vmem_to_hbm [thread:$0]  %s1368, 128, %s1370, [#allocation4]
    $region45: #{tpu_custom_call.1} parent=1 // pred_fallthru
      _
    // Predicated region
    $region46: #{tpu_custom_call.1} parent=1 // pred_check
      _
    $region47: #{tpu_custom_call.1} parent=1 // pred_check_branch
      %1374 = sbr.rel (0) target = $region49
    $region48: #{tpu_custom_call.1} parent=1 // pred_region
      %1376 = dma.done [#allocation4], 128
    $region49: #{tpu_custom_call.1} parent=1 // pred_fallthru
      _
    %1377 = vsyncpa [#allocation3], 1
    %1378 = vsyncpa [#allocation6], 1
    %1379 = vsyncpa [#allocation9], 1
    %1380 = vsyncpa [#allocation4], 1

</llo_original>
